<compile_context>
chip_gen: v5e
topology: v5e:2x2
jax: 0.10.0
libtpu: 0.0.40
codegen_flags: <defaults>
</compile_context>

<pallas_src>
import functools
import math

import jax
import jax.numpy as jnp
from jax import lax
from jax.experimental import pallas as pl
from jax.experimental.pallas import tpu as pltpu


# --------------------------------------------------------------------------
# Tile-size helper: largest divisor of `dim` that is <= target and a multiple
# of one of `aligns` (all alignments tried, best kept); falls back to the full
# dim (always a legal block shape).
# --------------------------------------------------------------------------
def _pick_tile(dim, target, aligns):
    if dim <= target:
        return dim
    if isinstance(aligns, int):
        aligns = (aligns,)
    best = 0
    for align in aligns:
        for t in range(min(target, dim), align - 1, -1):
            if dim % t == 0 and t % align == 0:
                best = max(best, t)
                break
    return best if best > 0 else dim


# --------------------------------------------------------------------------
# Kernel 1: tiled dense projection  out = x @ W + b
#   grid = (M/tm, N/tn, K/tk); f32 accumulator in VMEM scratch; bias folded
#   into the accumulator init; store on the last K step.  x/W are expected in
#   bf16 (caller casts); accumulation stays f32.
# --------------------------------------------------------------------------
def _linear_kernel(x_ref, w_ref, b_ref, o_ref, acc_ref):
    @pl.when(pl.program_id(2) == 0)
    def _init():
        # Fold the (f32) bias into the accumulator init — one broadcast/tile.
        acc_ref[...] = jnp.broadcast_to(
            b_ref[...].astype(jnp.float32), acc_ref.shape)

    acc_ref[...] += jnp.dot(x_ref[...], w_ref[...],
                            preferred_element_type=jnp.float32)

    @pl.when(pl.program_id(2) == pl.num_programs(2) - 1)
    def _store():
        o_ref[...] = acc_ref[...].astype(o_ref.dtype)


def pallas_linear(x, w, b, *, tm_target=512, tn_target=512, tk_target=512):
    M, K = x.shape
    K2, N = w.shape
    assert K == K2 and b.shape == (1, N)

    tm = _pick_tile(M, tm_target, (256, 8))
    tn = _pick_tile(N, tn_target, (256, 128))
    tk = _pick_tile(K, tk_target, (256, 128))
    grid = (M // tm, N // tn, K // tk)

    return pl.pallas_call(
        _linear_kernel,
        out_shape=jax.ShapeDtypeStruct((M, N), x.dtype),
        grid=grid,
        in_specs=[
            pl.BlockSpec((tm, tk), lambda i, j, k: (i, k)),
            pl.BlockSpec((tk, tn), lambda i, j, k: (k, j)),
            pl.BlockSpec((1, tn), lambda i, j, k: (0, j)),
        ],
        out_specs=pl.BlockSpec((tm, tn), lambda i, j, k: (i, j)),
        scratch_shapes=[pltpu.VMEM((tm, tn), jnp.float32)],
        compiler_params=pltpu.CompilerParams(
            dimension_semantics=("parallel", "parallel", "arbitrary")),
    )(x, w, b)


# --------------------------------------------------------------------------
# Kernel 2: flash-style causal attention (online softmax).  One (batch, head,
# q-block) accumulator streamed over KV blocks; q arrives pre-scaled.
#   * interior (fully-past) KV blocks skip the mask entirely
#   * fully-future KV blocks skip compute (and their DMA, via clamped index_map)
# --------------------------------------------------------------------------
def _flash_attn_kernel(q_ref, k_ref, v_ref, o_ref, m_ref, l_ref, acc_ref,
                       *, tq, tkv):
    qi = pl.program_id(2)
    kv = pl.program_id(3)
    nkv = pl.num_programs(3)

    @pl.when(kv == 0)
    def _init():
        m_ref[...] = jnp.full(m_ref.shape, -jnp.inf, dtype=jnp.float32)
        l_ref[...] = jnp.zeros(l_ref.shape, dtype=jnp.float32)
        acc_ref[...] = jnp.zeros(acc_ref.shape, dtype=jnp.float32)

    def _scores():
        # q @ k^T (bf16 operands, f32 result) without transposing k.
        return lax.dot_general(q_ref[...], k_ref[...],
                               (((1,), (1,)), ((), ())),
                               preferred_element_type=jnp.float32)

    def _online_softmax_update(s):
        v = v_ref[...]
        m_prev = m_ref[...]
        m_new = jnp.maximum(m_prev, jnp.max(s, axis=-1, keepdims=True))
        alpha = jnp.exp(m_prev - m_new)
        p = jnp.exp(s - m_new)
        l_ref[...] = alpha * l_ref[...] + jnp.sum(p, axis=-1, keepdims=True)
        acc_ref[...] = alpha * acc_ref[...] + jnp.dot(
            p.astype(v.dtype), v, preferred_element_type=jnp.float32)
        m_ref[...] = m_new

    needed = kv * tkv < (qi + 1) * tq            # any entry causally visible
    fully_past = (kv + 1) * tkv <= qi * tq       # whole block below diagonal

    @pl.when(fully_past)
    def _interior():                             # no mask needed
        _online_softmax_update(_scores())

    @pl.when(jnp.logical_and(needed, jnp.logical_not(fully_past)))
    def _diagonal():                             # mask only straddling blocks
        s = _scores()
        row = qi * tq + lax.broadcasted_iota(jnp.int32, s.shape, 0)
        col = kv * tkv + lax.broadcasted_iota(jnp.int32, s.shape, 1)
        # Large finite negative avoids -inf - -inf NaNs in the online update.
        _online_softmax_update(jnp.where(row >= col, s, -1e30))

    # NOTE: finalize only reads scratch, so it is safe even when the last KV
    # block's compute was skipped for early q blocks.
    @pl.when(kv == nkv - 1)
    def _finalize():
        inv_l = pl.reciprocal(l_ref[...], approx=True)
        o_ref[...] = (acc_ref[...] * inv_l).astype(o_ref.dtype)


def pallas_flash_attention(q, k, v, *, tq_target=512, tkv_target=512):
    # q, k, v : (B, H, T, hd); q is expected pre-scaled by 1/sqrt(hd).
    B, H, T, hd = q.shape

    tq = _pick_tile(T, tq_target, (128, 8))
    tkv = _pick_tile(T, tkv_target, (128, 8))
    nq, nkv = T // tq, T // tkv

    def q_index(b, h, qi, kv):
        return (b, h, qi, 0)

    def kv_index(b, h, qi, kv):
        # Clamp fully-future KV block indices to the last needed block so the
        # skipped-compute iterations map to the already-resident tile and
        # Pallas elides their HBM->VMEM DMA.
        last_needed = ((qi + 1) * tq - 1) // tkv
        return (b, h, jnp.minimum(kv, last_needed), 0)

    q_spec = pl.BlockSpec((pl.Squeezed(), pl.Squeezed(), tq, hd), q_index)
    kv_spec = pl.BlockSpec((pl.Squeezed(), pl.Squeezed(), tkv, hd), kv_index)
    o_spec = pl.BlockSpec((pl.Squeezed(), pl.Squeezed(), tq, hd), q_index)

    kernel = functools.partial(_flash_attn_kernel, tq=tq, tkv=tkv)

    return pl.pallas_call(
        kernel,
        out_shape=jax.ShapeDtypeStruct((B, H, T, hd), q.dtype),
        grid=(B, H, nq, nkv),
        in_specs=[q_spec, kv_spec, kv_spec],
        out_specs=o_spec,
        scratch_shapes=[
            pltpu.VMEM((tq, 1), jnp.float32),    # running max m
            pltpu.VMEM((tq, 1), jnp.float32),    # running sum l
            pltpu.VMEM((tq, hd), jnp.float32),   # output accumulator
        ],
        compiler_params=pltpu.CompilerParams(
            dimension_semantics=("parallel", "parallel", "parallel",
                                 "arbitrary")),
    )(q, k, v)


# --------------------------------------------------------------------------
# Full module forward (glue in plain JAX, hot paths in Pallas)
# --------------------------------------------------------------------------
def causal_self_attention_forward(x, params, n_head,
                                  *, compute_dtype=jnp.bfloat16):
    B, T, C = x.shape
    hd = C // n_head
    scale = 1.0 / math.sqrt(hd)

    # qkv projection in bf16 (f32 accumulation inside the kernel).
    x2 = x.reshape(B * T, C).astype(compute_dtype)
    w_attn = params["w_attn"].astype(compute_dtype)
    w_proj = params["w_proj"].astype(compute_dtype)

    qkv = pallas_linear(x2, w_attn, params["b_attn"])            # (B*T, 3C) bf16
    qkv = qkv.reshape(B, T, 3, n_head, hd)

    # Softmax scale folded into q here (fused by XLA into the slice/transpose)
    # so the attention kernel never multiplies the (tq, tkv) score tile.
    q = jnp.transpose(qkv[:, :, 0] * scale, (0, 2, 1, 3))        # (B, H, T, hd)
    k = jnp.transpose(qkv[:, :, 1], (0, 2, 1, 3))
    v = jnp.transpose(qkv[:, :, 2], (0, 2, 1, 3))

    # Causal flash attention (bf16 operands, f32 softmax stats / accumulator).
    y = pallas_flash_attention(q, k, v)                          # (B, H, T, hd)

    # back to (B*T, C) and output projection
    y = jnp.transpose(y, (0, 2, 1, 3)).reshape(B * T, C)
    out = pallas_linear(y, w_proj, params["b_proj"])
    return out.astype(x.dtype).reshape(B, T, C)


# --------------------------------------------------------------------------
# Pure-JAX f32 reference (same math) for correctness checking
# --------------------------------------------------------------------------
def reference_forward(x, params, n_head):
    B, T, C = x.shape
    hd = C // n_head
    qkv = x.reshape(B * T, C) @ params["w_attn"] + params["b_attn"]
    qkv = qkv.reshape(B, T, 3, n_head, hd)
    q = jnp.transpose(qkv[:, :, 0], (0, 2, 1, 3))
    k = jnp.transpose(qkv[:, :, 1], (0, 2, 1, 3))
    v = jnp.transpose(qkv[:, :, 2], (0, 2, 1, 3))
    s = jnp.einsum("bhqd,bhkd->bhqk", q, k) / math.sqrt(hd)
    mask = jnp.tril(jnp.ones((T, T), dtype=bool))
    s = jnp.where(mask, s, -jnp.inf)
    p = jax.nn.softmax(s, axis=-1)
    y = jnp.einsum("bhqk,bhkd->bhqd", p, v)
    y = jnp.transpose(y, (0, 2, 1, 3)).reshape(B * T, C)
    out = y @ params["w_proj"] + params["b_proj"]
    return out.reshape(B, T, C)


# --------------------------------------------------------------------------
# Deterministic parameter init (shapes from CausalSelfAttention.__init__)
# --------------------------------------------------------------------------
def init_params(key, n_embd):
    k1, k2, k3, k4 = jax.random.split(key, 4)
    lim = 1.0 / math.sqrt(n_embd)
    # stored transposed w.r.t. PyTorch: (in, out)
    w_attn = jax.random.uniform(k1, (n_embd, 3 * n_embd), jnp.float32, -lim, lim)
    b_attn = jax.random.uniform(k2, (1, 3 * n_embd), jnp.float32, -lim, lim)
    w_proj = jax.random.uniform(k3, (n_embd, n_embd), jnp.float32, -lim, lim)
    b_proj = jax.random.uniform(k4, (1, n_embd), jnp.float32, -lim, lim)
    return dict(w_attn=w_attn, b_attn=b_attn, w_proj=w_proj, b_proj=b_proj)


if __name__ == "__main__":
    # Small config: B=2, T=8, n_embd=32, n_head=4 -> head_dim=8
    B, T, n_embd, n_head = 2, 8, 32, 4

    key = jax.random.PRNGKey(0)
    kx, kp = jax.random.split(key)
    x = jax.random.normal(kx, (B, T, n_embd), dtype=jnp.float32)
    params = init_params(kp, n_embd)

    y = causal_self_attention_forward(x, params, n_head)
    y = jax.block_until_ready(y)

    y_ref = reference_forward(x, params, n_head)

    assert y.shape == (B, T, n_embd)
    assert bool(jnp.all(jnp.isfinite(y)))
    max_err = float(jnp.max(jnp.abs(y - y_ref)))
    # bf16 matmul operands (f32 accumulation) -> relaxed tolerance vs f32 ref.
    assert jnp.allclose(y, y_ref, rtol=2e-2, atol=2e-2), max_err
    print("KERNEL_OK")
</pallas_src>

<mosaic_0001>
module attributes {stable_mosaic.version = 11 : i64} {
  func.func @_linear_kernel(%arg0: i32, %arg1: i32, %arg2: i32, %arg3: memref<16x32xbf16, #tpu.memory_space<vmem>>, %arg4: memref<32x96xbf16, #tpu.memory_space<vmem>>, %arg5: memref<1x96xf32, #tpu.memory_space<vmem>>, %arg6: memref<16x96xbf16, #tpu.memory_space<vmem>>, %arg7: memref<16x96xf32, #tpu.memory_space<vmem>>) attributes {dimension_semantics = [#tpu.dimension_semantics<parallel>, #tpu.dimension_semantics<parallel>, #tpu.dimension_semantics<arbitrary>], iteration_bounds = array<i64: 1, 1, 1>, scalar_prefetch = 0 : i64, scratch_operands = 1 : i64, tpu.core_type = #tpu.core_type<tc>, window_params = [{transform_indices = @transform_0, window_bounds = array<i64: 16, 32>}, {transform_indices = @transform_1, window_bounds = array<i64: 32, 96>}, {transform_indices = @transform_2, window_bounds = array<i64: 1, 96>}, {transform_indices = @transform_3, window_bounds = array<i64: 16, 96>}]} {
    %c0_i32 = arith.constant 0 : i32
    %0 = arith.cmpi eq, %arg2, %c0_i32 : i32
    %1 = arith.extui %0 : i1 to i32
    %c0_i32_0 = arith.constant 0 : i32
    %2 = arith.cmpi ne, %1, %c0_i32_0 : i32
    scf.if %2 {
      %c0_10 = arith.constant 0 : index
      %c0_11 = arith.constant 0 : index
      %12 = vector.load %arg5[%c0_10, %c0_11] : memref<1x96xf32, #tpu.memory_space<vmem>>, vector<1x96xf32>
      %13 = vector.shape_cast %12 : vector<1x96xf32> to vector<1x96xf32>
      %14 = vector.broadcast %13 : vector<1x96xf32> to vector<16x96xf32>
      %c0_12 = arith.constant 0 : index
      %c0_13 = arith.constant 0 : index
      %15 = vector.load %arg7[%c0_12, %c0_13] : memref<16x96xf32, #tpu.memory_space<vmem>>, vector<16x96xf32>
      tpu.vector_store %arg7[%c0_12, %c0_13], %14 {strides = array<i32>} : memref<16x96xf32, #tpu.memory_space<vmem>>, vector<16x96xf32>,
    } else {
    }
    %c0 = arith.constant 0 : index
    %c0_1 = arith.constant 0 : index
    %3 = vector.load %arg7[%c0, %c0_1] : memref<16x96xf32, #tpu.memory_space<vmem>>, vector<16x96xf32>
    %c0_2 = arith.constant 0 : index
    %c0_3 = arith.constant 0 : index
    %4 = vector.load %arg3[%c0_2, %c0_3] : memref<16x32xbf16, #tpu.memory_space<vmem>>, vector<16x32xbf16>
    %c0_4 = arith.constant 0 : index
    %c0_5 = arith.constant 0 : index
    %5 = vector.load %arg4[%c0_4, %c0_5] : memref<32x96xbf16, #tpu.memory_space<vmem>>, vector<32x96xbf16>
    %cst = arith.constant dense<0.000000e+00> : vector<16x96xf32>
    %6 = tpu.matmul %4, %5, %cst {dimension_numbers = #tpu.dot_dimension_numbers<[1], [0], [0], [1], [0, 0, 1, 1], [], []>} : vector<16x32xbf16>, vector<32x96xbf16>, vector<16x96xf32> -> vector<16x96xf32>
    %7 = arith.addf %3, %6 : vector<16x96xf32>
    %c0_6 = arith.constant 0 : index
    %c0_7 = arith.constant 0 : index
    %8 = vector.load %arg7[%c0_6, %c0_7] : memref<16x96xf32, #tpu.memory_space<vmem>>, vector<16x96xf32>
    tpu.vector_store %arg7[%c0_6, %c0_7], %7 {strides = array<i32>} : memref<16x96xf32, #tpu.memory_space<vmem>>, vector<16x96xf32>,
    %c0_i32_8 = arith.constant 0 : i32
    %9 = arith.cmpi eq, %arg2, %c0_i32_8 : i32
    %10 = arith.extui %9 : i1 to i32
    %c0_i32_9 = arith.constant 0 : i32
    %11 = arith.cmpi ne, %10, %c0_i32_9 : i32
    scf.if %11 {
      %c0_10 = arith.constant 0 : index
      %c0_11 = arith.constant 0 : index
      %12 = vector.load %arg7[%c0_10, %c0_11] : memref<16x96xf32, #tpu.memory_space<vmem>>, vector<16x96xf32>
      %13 = arith.truncf %12 : vector<16x96xf32> to vector<16x96xbf16>
      %c0_12 = arith.constant 0 : index
      %c0_13 = arith.constant 0 : index
      %14 = vector.load %arg6[%c0_12, %c0_13] : memref<16x96xbf16, #tpu.memory_space<vmem>>, vector<16x96xbf16>
      tpu.vector_store %arg6[%c0_12, %c0_13], %13 {strides = array<i32>} : memref<16x96xbf16, #tpu.memory_space<vmem>>, vector<16x96xbf16>,
    } else {
    }
    return
  }
  func.func @transform_0(%arg0: i32, %arg1: i32, %arg2: i32) -> (i32, i32) {
    %c0_i32 = arith.constant 0 : i32
    return %arg0, %arg2 : i32, i32
  }
  func.func @transform_1(%arg0: i32, %arg1: i32, %arg2: i32) -> (i32, i32) {
    %c0_i32 = arith.constant 0 : i32
    return %arg2, %arg1 : i32, i32
  }
  func.func @transform_2(%arg0: i32, %arg1: i32, %arg2: i32) -> (i32, i32) {
    %c0_i32 = arith.constant 0 : i32
    %c0_i32_0 = arith.constant 0 : i32
    return %c0_i32, %arg1 : i32, i32
  }
  func.func @transform_3(%arg0: i32, %arg1: i32, %arg2: i32) -> (i32, i32) {
    %c0_i32 = arith.constant 0 : i32
    return %arg0, %arg1 : i32, i32
  }
}

</mosaic_0001>

<llo_original>
// kernel: tpu_custom_call.1
$region0: #{tpu_custom_call.1}
  #allocation0 [shape = 'u32[]', space=smem, size = 0x4, offset = 0x4, fixed_abs, tag = 'smem constant byte address 0x4 - core index']
  #allocation1 [shape = 'u32[72,128]{1,0:T(1,128)}', space=vmem, size = 0x9000, scoped, tag = 'internal scratch']
  #allocation2 [shape = 'f32[16,96]{1,0:T(8,128)}', space=vmem, size = 0x2000, scoped, tag = 'scratch operand']
  %s0 = inlined_call_operand.hbm [shape: bf16[16,32], index: 0, kind: input, shape index: {}]
  %s1 = inlined_call_operand.hbm [shape: bf16[32,96], index: 1, kind: input, shape index: {}]
  %s2 = inlined_call_operand.vmem [shape: f32[1,96], index: 2, kind: input, shape index: {}]
  %s3 = inlined_call_operand.hbm [shape: bf16[16,96], index: 3, kind: output, shape index: {}]
  %s4 = sld [smem:[#allocation0]]
  $region38: #{tpu_custom_call.1} parent=0
    _
  %s6 = ssub.s32 1, %s4
  %s7 = scalar_select 0, %s6, %s4
  $region1: #{tpu_custom_call.1} parent=0
    #allocation3 [shape = 'u8[4096]{0}', space=vmem, size = 0x1000, scoped, tag = 'input window, operand 0, single buffered']
    #allocation4 [shape = 's32[1]{0}', space=sflag, size = 0x4, scoped, tag = 'scoped memory for tpu_custom_call.1']
    #allocation5 [shape = 's32[1]{0}', space=sflag, size = 0x4, scoped, tag = 'scoped memory for tpu_custom_call.1']
    #allocation6 [shape = 'u8[8192]{0}', space=vmem, size = 0x2000, scoped, tag = 'input window, operand 1, single buffered']
    #allocation7 [shape = 's32[1]{0}', space=sflag, size = 0x4, scoped, tag = 'scoped memory for tpu_custom_call.1']
    #allocation8 [shape = 'u8[4096]{0}', space=vmem, size = 0x1000, scoped, tag = 'output window, operand 0, single buffered']
    %8 = vsyncpa [#allocation4], 0
    %9 = vsyncpa [#allocation7], 0
    %10 = vsyncpa [#allocation5], 0
    // Predicated region
    $region2: #{tpu_custom_call.1} parent=1 // pred_check
      _
    $region3: #{tpu_custom_call.1} parent=1 // pred_check_branch
      %12 = sbr.rel (0) target = $region5
    $region4: #{tpu_custom_call.1} parent=1 // pred_region
      %14 = vsyncadd [#allocation4], 0
      %s15 = sshll.u32 %s0, 4
      %s16 = int_to_ptr.hbm [resolvable:$true] %s15
      %s17 = sshll.u32 [#allocation3], 4
      %s18 = int_to_ptr.vmem [resolvable:$true] %s17
      %23 = dma.hbm_to_vmem [thread:$0]  %s16, 128, %s18, [#allocation4], 64, 64, 4
    $region5: #{tpu_custom_call.1} parent=1 // pred_fallthru
      _
    // Predicated region
    $region6: #{tpu_custom_call.1} parent=1 // pred_check
      _
    $region7: #{tpu_custom_call.1} parent=1 // pred_check_branch
      %25 = sbr.rel (0) target = $region9
    $region8: #{tpu_custom_call.1} parent=1 // pred_region
      %27 = vsyncadd [#allocation7], 0
      %s28 = sshll.u32 %s1, 4
      %s29 = int_to_ptr.hbm [resolvable:$true] %s28
      %s30 = sshll.u32 [#allocation6], 4
      %s31 = int_to_ptr.vmem [resolvable:$true] %s30
      %36 = dma.hbm_to_vmem [thread:$0]  %s29, 256, %s31, [#allocation7], 64, 64, 4
    $region9: #{tpu_custom_call.1} parent=1 // pred_fallthru
      _
    // Predicated region
    $region10: #{tpu_custom_call.1} parent=1 // pred_check
      _
    $region11: #{tpu_custom_call.1} parent=1 // pred_check_branch
      %38 = sbr.rel (0) target = $region13
    $region12: #{tpu_custom_call.1} parent=1 // pred_region
      _
    $region13: #{tpu_custom_call.1} parent=1 // pred_fallthru
      _
    // Predicated region
    $region14: #{tpu_custom_call.1} parent=1 // pred_check
      _
    $region15: #{tpu_custom_call.1} parent=1 // pred_check_branch
      %40 = sbr.rel (0) target = $region17
    $region16: #{tpu_custom_call.1} parent=1 // pred_region
      %42 = dma.done [#allocation4], 128
    $region17: #{tpu_custom_call.1} parent=1 // pred_fallthru
      _
    // Predicated region
    $region18: #{tpu_custom_call.1} parent=1 // pred_check
      _
    $region19: #{tpu_custom_call.1} parent=1 // pred_check_branch
      %44 = sbr.rel (0) target = $region21
    $region20: #{tpu_custom_call.1} parent=1 // pred_region
      %46 = dma.done [#allocation7], 256
    $region21: #{tpu_custom_call.1} parent=1 // pred_fallthru
      _
    %p48 = scmp.eq.s32.totalorder 0, 0
    // Predicated region
    $region22: #{tpu_custom_call.1} parent=1 // pred_check
      %p49 = pneg %p48
    $region23: #{tpu_custom_call.1} parent=1 // pred_check_branch
      %51 = sbr.rel (%p49) target = $region25
    $region24: #{tpu_custom_call.1} parent=1 // pred_region
      %v52 = vld [vmem:[%s2] sm:$0x1]
      %v54 = vperm.slane %v52, 0
      %vm56 = vcmask 785408
      %57 = vst.msk [vmem:[#allocation2] sm:$0xff] %vm56, %v54
      %58 = vst.msk [vmem:[#allocation2 + $0x8] sm:$0xff] %vm56, %v54
    $region25: #{tpu_custom_call.1} parent=1 // pred_fallthru
      _
    %v59 = vld [vmem:[#allocation2] sm:$0xff]
    %v60 = vld [vmem:[#allocation2 + $0x8] sm:$0xff]
    %v61 = vld [vmem:[#allocation3] sm:$0xf]
    %v62 = vld [vmem:[#allocation3 + $0x4] sm:$0xf]
    %v63 = vld [vmem:[#allocation6] sm:$0xf]
    %v64 = vld [vmem:[#allocation6 + $0x4] sm:$0xf]
    %v65 = vld [vmem:[#allocation6 + $0x8] sm:$0xf]
    %v66 = vld [vmem:[#allocation6 + $0xc] sm:$0xf]
    %v69 = vunpack.c.l.b16 %v61
    %v70 = vunpack.c.l.b16 %v62
    %v71 = vpack.c.b16 %v70, %v69
    %v76 = vunpack.c.l.b16 %v63
    %v77 = vunpack.c.l.b16 %v64
    %v78 = vunpack.c.l.b16 %v65
    %v79 = vunpack.c.l.b16 %v66
    %v80 = vpack.c.b16 %v77, %v76
    %v81 = vpack.c.b16 %v79, %v78
    %vm84 = vcmask 261120
    %v86 = vsel %vm84, %v71, 0
    %88 = vmatpush.bf16.msra.mxu0 0
    %89 = vmatpush.bf16.msra.mxu0 0
    %90 = vmatpush.bf16.msra.mxu0 0
    %91 = vmatpush.bf16.msra.mxu0 0
    %92 = vmatpush.bf16.msra.mxu0 0
    %93 = vmatpush.bf16.msra.mxu0 0
    %94 = vmatpush.bf16.msra.mxu0 %v81
    %95 = vmatpush.bf16.msra.mxu0 %v80
    %96 = vmatmul.bf16.gmra.mxu0 %v86
    %v97 = vpop.f32.mrf.mxu0
    %v98 = vadd.f32 0.0, %v97
    %v99 = vpop.f32.mrf.mxu0
    %v100 = vadd.f32 0.0, %v99
    %101 = vdwg.mxu0
    %v102 = vadd.f32 %v59, %v98
    %v103 = vadd.f32 %v60, %v100
    %vm104 = vcmask 785408
    %105 = vst.msk [vmem:[#allocation2] sm:$0xff] %vm104, %v102
    %106 = vst.msk [vmem:[#allocation2 + $0x8] sm:$0xff] %vm104, %v103
    // Predicated region
    $region26: #{tpu_custom_call.1} parent=1 // pred_check
      %p107 = pneg %p48
    $region27: #{tpu_custom_call.1} parent=1 // pred_check_branch
      %109 = sbr.rel (%p107) target = $region29
    $region28: #{tpu_custom_call.1} parent=1 // pred_region
      %v110 = vld [vmem:[#allocation2] sm:$0xff]
      %v111 = vld [vmem:[#allocation2 + $0x8] sm:$0xff]
      %v112 = vpack.c.bf16 %v110, %v110
      %v113 = vpack.c.bf16 %v111, %v111
      %vm114 = vcmask 781312
      %115 = vst.msk [vmem:[#allocation8] sm:$0xf] %vm114, %v112
      %116 = vst.msk [vmem:[#allocation8 + $0x4] sm:$0xf] %vm114, %v113
    $region29: #{tpu_custom_call.1} parent=1 // pred_fallthru
      _
    // Predicated region
    $region30: #{tpu_custom_call.1} parent=1 // pred_check
      _
    $region31: #{tpu_custom_call.1} parent=1 // pred_check_branch
      %118 = sbr.rel (0) target = $region33
    $region32: #{tpu_custom_call.1} parent=1 // pred_region
      %120 = vsyncadd [#allocation5], 0
      %s121 = sshll.u32 [#allocation8], 4
      %s122 = int_to_ptr.vmem [resolvable:$true] %s121
      %s123 = sshll.u32 %s3, 4
      %s124 = int_to_ptr.hbm [resolvable:$true] %s123
      %129 = dma.vmem_to_hbm [thread:$0]  %s122, 128, %s124, [#allocation5], 64, 64, 4
    $region33: #{tpu_custom_call.1} parent=1 // pred_fallthru
      _
    // Predicated region
    $region34: #{tpu_custom_call.1} parent=1 // pred_check
      _
    $region35: #{tpu_custom_call.1} parent=1 // pred_check_branch
      %131 = sbr.rel (0) target = $region37
    $region36: #{tpu_custom_call.1} parent=1 // pred_region
      %133 = dma.done [#allocation5], 128
    $region37: #{tpu_custom_call.1} parent=1 // pred_fallthru
      _
    %134 = vsyncpa [#allocation4], 1
    %135 = vsyncpa [#allocation7], 1
    %136 = vsyncpa [#allocation5], 1

</llo_original>
